<compile_context>
chip_gen: v5e
topology: v5e:2x2
jax: 0.10.0
libtpu: 0.0.40
codegen_flags: <defaults>
</compile_context>

<pallas_src>
import functools
from math import sqrt

import jax
import jax.numpy as jnp
from jax.experimental import pallas as pl
from jax.experimental.pallas import tpu as pltpu


# ----------------------------------------------------------------------------
# Pallas kernel: fused elementwise scale of the stacked (node | edge) noise.
#   rows [0, rows_node)        -> * node_std
#   rows [rows_node, total)    -> * edge_std
# std values are compile-time constants (baked via functools.partial).
# ----------------------------------------------------------------------------
def _fused_scale_kernel(noise_ref, out_ref, *, rows_node, node_std, edge_std, tile_r):
    row0 = pl.program_id(0) * tile_r
    row_ids = row0 + jax.lax.broadcasted_iota(jnp.int32, out_ref.shape, 0)
    scale = jnp.where(row_ids < rows_node,
                      jnp.float32(node_std), jnp.float32(edge_std))
    out_ref[...] = noise_ref[...] * scale


def _round_up(a: int, b: int) -> int:
    return ((a + b - 1) // b) * b


def _pad_lane_dense(v_1d: jnp.ndarray):
    """Pad a 1-D f32 vector into a lane-dense (rows, 128) tile, rows % 8 == 0."""
    n = v_1d.shape[0]
    rows = _round_up(max(pl.cdiv(n, 128), 1), 8)
    padded = jnp.pad(v_1d.astype(jnp.float32), (0, rows * 128 - n))
    return padded.reshape(rows, 128), rows


def init_masks_pallas(node_noise: jnp.ndarray, edge_noise: jnp.ndarray,
                      node_std: float, edge_std: float):
    """Single fused pallas_call producing both node_feat_mask and edge_mask."""
    F = node_noise.shape[0]
    E = edge_noise.shape[0]

    node2d, rows_n = _pad_lane_dense(node_noise)
    edge2d, rows_e = _pad_lane_dense(edge_noise)
    noise_all = jnp.concatenate([node2d, edge2d], axis=0)     # (total, 128) lane-dense
    total = rows_n + rows_e

    # Tile: up to 1024 rows x 128 lanes of f32 = 512 KiB per buffer; with in+out
    # double-buffered that is ~2 MiB, comfortably inside every generation's
    # scoped-VMEM default (v5e 16 MiB / v6e 32 MiB / v7x 32 MiB).
    tile_r = min(total, 1024)                                  # multiple of 8
    grid = (pl.cdiv(total, tile_r),)

    kernel = functools.partial(
        _fused_scale_kernel,
        rows_node=rows_n,
        node_std=float(node_std),
        edge_std=float(edge_std),
        tile_r=tile_r,
    )

    out = pl.pallas_call(
        kernel,
        out_shape=jax.ShapeDtypeStruct((total, 128), jnp.float32),
        grid=grid,
        in_specs=[pl.BlockSpec((tile_r, 128), lambda i: (i, 0))],
        out_specs=pl.BlockSpec((tile_r, 128), lambda i: (i, 0)),
        compiler_params=pltpu.CompilerParams(
            dimension_semantics=("parallel",),          # shards across TCs on v7x
            vmem_limit_bytes=32 * 1024 * 1024,          # explicit, safe on v5e/v6e/v7x
        ),
    )(noise_all)

    node_feat_mask = out[:rows_n].reshape(-1)[:F]
    edge_mask = out[rows_n:].reshape(-1)[:E]
    return node_feat_mask, edge_mask


# ----------------------------------------------------------------------------
# ExplainerBase in JAX
# ----------------------------------------------------------------------------
class ExplainerBase:
    def __init__(self, model=None, epochs=0, lr=0, explain_graph=False, molecule=False):
        self.model = model
        self.lr = lr
        self.epochs = epochs
        self.explain_graph = explain_graph
        self.molecule = molecule
        # No MessagePassing modules in this synthetic setup.
        self.mp_layers = []
        self.num_layers = len(self.mp_layers)
        self.ori_pred = None
        self.ex_labels = None
        self.edge_mask = None
        self.hard_edge_mask = None
        self.num_edges = None
        self.num_nodes = None
        self.device = None
        self.node_feat_mask = None

    # forward() semantics: record graph sizes / device, return None.
    def forward(self, x: jnp.ndarray, edge_index: jnp.ndarray, **kwargs):
        self.num_edges = edge_index.shape[1]
        self.num_nodes = x.shape[0]
        self.device = list(x.devices())[0]

    __call__ = forward

    # __set_masks__ semantics; the elementwise scaling runs in one fused Pallas call.
    def set_masks(self, x: jnp.ndarray, edge_index: jnp.ndarray, key, init="normal"):
        (N, F), E = (x.shape, edge_index.shape[1])
        k1, k2 = jax.random.split(key)

        node_noise = jax.random.normal(k1, (F,), dtype=jnp.float32)
        edge_noise = jax.random.normal(k2, (E,), dtype=jnp.float32)

        node_std = 0.1
        edge_std = sqrt(2.0) * sqrt(2.0 / (2.0 * N))  # calculate_gain('relu') * sqrt(2/(2N))

        self.node_feat_mask, self.edge_mask = init_masks_pallas(
            node_noise, edge_noise, node_std, edge_std)
        return self.node_feat_mask, self.edge_mask


# ----------------------------------------------------------------------------
# Driver
# ----------------------------------------------------------------------------
if __name__ == "__main__":
    key = jax.random.PRNGKey(0)
    kx, ke, km = jax.random.split(key, 3)

    N, F, E = 16, 32, 40
    x = jax.random.normal(kx, (N, F), dtype=jnp.float32)                 # node features [N, F]
    edge_index = jax.random.randint(ke, (2, E), 0, N, dtype=jnp.int32)   # [2, E]

    explainer = ExplainerBase(model=None, epochs=0, lr=0.0, explain_graph=False)

    # forward pass (bookkeeping, matches the PyTorch semantics exactly)
    explainer(x, edge_index)
    assert explainer.num_nodes == N
    assert explainer.num_edges == E

    # mask initialization — the fused Pallas kernel
    node_feat_mask, edge_mask = explainer.set_masks(x, edge_index, km)
    node_feat_mask = jax.block_until_ready(node_feat_mask)
    edge_mask = jax.block_until_ready(edge_mask)

    # sanity check against the pure-JAX reference of the same compute
    k1, k2 = jax.random.split(km)
    ref_node = jax.random.normal(k1, (F,), dtype=jnp.float32) * 0.1
    ref_edge = jax.random.normal(k2, (E,), dtype=jnp.float32) * (sqrt(2.0) * sqrt(2.0 / (2.0 * N)))
    assert node_feat_mask.shape == (F,) and edge_mask.shape == (E,)
    assert jnp.allclose(node_feat_mask, ref_node, atol=1e-6)
    assert jnp.allclose(edge_mask, ref_edge, atol=1e-6)

    print("KERNEL_OK")
</pallas_src>

<mosaic_0001>
module attributes {stable_mosaic.version = 11 : i64} {
  func.func @_fused_scale_kernel(%arg0: i32, %arg1: memref<16x128xf32, #tpu.memory_space<vmem>>, %arg2: memref<16x128xf32, #tpu.memory_space<vmem>>) attributes {dimension_semantics = [#tpu.dimension_semantics<parallel>], iteration_bounds = array<i64: 1>, scalar_prefetch = 0 : i64, scratch_operands = 0 : i64, tpu.core_type = #tpu.core_type<tc>, window_params = [{transform_indices = @transform_0, window_bounds = array<i64: 16, 128>}, {transform_indices = @transform_1, window_bounds = array<i64: 16, 128>}]} {
    %c16_i32 = arith.constant 16 : i32
    %0 = arith.muli %arg0, %c16_i32 : i32
    %1 = tpu.iota {dimensions = array<i32: 0>} : vector<16x128xi32>
    %2 = vector.broadcast %0 : i32 to vector<16x128xi32>
    %3 = arith.addi %2, %1 : vector<16x128xi32>
    %c8_i32 = arith.constant 8 : i32
    %4 = vector.broadcast %c8_i32 : i32 to vector<16x128xi32>
    %5 = arith.cmpi slt, %3, %4 : vector<16x128xi32>
    %cst = arith.constant 1.000000e-01 : f32
    %cst_0 = arith.constant 0.353553385 : f32
    %6 = vector.broadcast %cst : f32 to vector<16x128xf32>
    %7 = vector.broadcast %cst_0 : f32 to vector<16x128xf32>
    %8 = arith.select %5, %6, %7 : vector<16x128xi1>, vector<16x128xf32>
    %c0 = arith.constant 0 : index
    %c0_1 = arith.constant 0 : index
    %9 = vector.load %arg1[%c0, %c0_1] : memref<16x128xf32, #tpu.memory_space<vmem>>, vector<16x128xf32>
    %10 = arith.mulf %9, %8 : vector<16x128xf32>
    %c0_2 = arith.constant 0 : index
    %c0_3 = arith.constant 0 : index
    %11 = vector.load %arg2[%c0_2, %c0_3] : memref<16x128xf32, #tpu.memory_space<vmem>>, vector<16x128xf32>
    tpu.vector_store %arg2[%c0_2, %c0_3], %10 {strides = array<i32>} : memref<16x128xf32, #tpu.memory_space<vmem>>, vector<16x128xf32>,
    return
  }
  func.func @transform_0(%arg0: i32) -> (i32, i32) {
    %c0_i32 = arith.constant 0 : i32
    %c0_i32_0 = arith.constant 0 : i32
    return %arg0, %c0_i32 : i32, i32
  }
  func.func @transform_1(%arg0: i32) -> (i32, i32) {
    %c0_i32 = arith.constant 0 : i32
    %c0_i32_0 = arith.constant 0 : i32
    return %arg0, %c0_i32 : i32, i32
  }
}

</mosaic_0001>

<llo_original>
// kernel: tpu_custom_call.1
$region0: #{tpu_custom_call.1}
  #allocation0 [shape = 'u32[]', space=smem, size = 0x4, offset = 0x4, fixed_abs, tag = 'smem constant byte address 0x4 - core index']
  #allocation1 [shape = 'u32[72,128]{1,0:T(1,128)}', space=vmem, size = 0x9000, scoped, tag = 'internal scratch']
  %s0 = inlined_call_operand.hbm [shape: f32[16,128], index: 0, kind: input, shape index: {}]
  %s1 = inlined_call_operand.hbm [shape: f32[16,128], index: 1, kind: output, shape index: {}]
  %s2 = sld [smem:[#allocation0]]
  $region18: #{tpu_custom_call.1} parent=0
    _
  %s4 = ssub.s32 1, %s2
  %s5 = scalar_select 0, %s4, %s2
  $region1: #{tpu_custom_call.1} parent=0
    #allocation2 [shape = 'u8[8192]{0}', space=vmem, size = 0x2000, scoped, tag = 'input window, operand 0, single buffered']
    #allocation3 [shape = 's32[1]{0}', space=sflag, size = 0x4, scoped, tag = 'scoped memory for tpu_custom_call.1']
    #allocation4 [shape = 's32[1]{0}', space=sflag, size = 0x4, scoped, tag = 'scoped memory for tpu_custom_call.1']
    #allocation5 [shape = 'u8[8192]{0}', space=vmem, size = 0x2000, scoped, tag = 'output window, operand 0, single buffered']
    %6 = vsyncpa [#allocation3], 0
    %7 = vsyncpa [#allocation4], 0
    // Predicated region
    $region2: #{tpu_custom_call.1} parent=1 // pred_check
      _
    $region3: #{tpu_custom_call.1} parent=1 // pred_check_branch
      %9 = sbr.rel (0) target = $region5
    $region4: #{tpu_custom_call.1} parent=1 // pred_region
      %11 = vsyncadd [#allocation3], 0
      %s12 = sshll.u32 %s0, 4
      %s13 = int_to_ptr.hbm [resolvable:$true] %s12
      %s14 = sshll.u32 [#allocation2], 4
      %s15 = int_to_ptr.vmem [resolvable:$true] %s14
      %20 = dma.hbm_to_vmem [thread:$0]  %s13, 256, %s15, [#allocation3], 128, 128, 8
    $region5: #{tpu_custom_call.1} parent=1 // pred_fallthru
      _
    // Predicated region
    $region6: #{tpu_custom_call.1} parent=1 // pred_check
      _
    $region7: #{tpu_custom_call.1} parent=1 // pred_check_branch
      %22 = sbr.rel (0) target = $region9
    $region8: #{tpu_custom_call.1} parent=1 // pred_region
      %24 = dma.done [#allocation3], 256
    $region9: #{tpu_custom_call.1} parent=1 // pred_fallthru
      _
    %s25 = smul.u32 0, 16
    %v26 = vlaneseq
    %v27 = vshrl.u32 %v26, 7
    %v28 = vadd.s32 %v27, 8
    %v29 = vstv %s25
    %v30 = vadd.s32 %v29, %v27
    %v31 = vadd.s32 %v29, %v28
    %vm32 = vcmp.lt.s32.totalorder %v30, 8
    %vm33 = vcmp.lt.s32.totalorder %v31, 8
    %v34 = vsel %vm32, 0.1, 0.35355338
    %v35 = vsel %vm33, 0.1, 0.35355338
    %v36 = vld [vmem:[#allocation2] sm:$0xff]
    %v37 = vld [vmem:[#allocation2 + $0x8] sm:$0xff]
    %v38 = vmul.f32 %v36, %v34
    %v39 = vmul.f32 %v37, %v35
    %40 = vst [vmem:[#allocation5] sm:$0xff] %v38
    %41 = vst [vmem:[#allocation5 + $0x8] sm:$0xff] %v39
    // Predicated region
    $region10: #{tpu_custom_call.1} parent=1 // pred_check
      _
    $region11: #{tpu_custom_call.1} parent=1 // pred_check_branch
      %43 = sbr.rel (0) target = $region13
    $region12: #{tpu_custom_call.1} parent=1 // pred_region
      %45 = vsyncadd [#allocation4], 0
      %s46 = sshll.u32 [#allocation5], 4
      %s47 = int_to_ptr.vmem [resolvable:$true] %s46
      %s48 = sshll.u32 %s1, 4
      %s49 = int_to_ptr.hbm [resolvable:$true] %s48
      %54 = dma.vmem_to_hbm [thread:$0]  %s47, 256, %s49, [#allocation4], 128, 128, 8
    $region13: #{tpu_custom_call.1} parent=1 // pred_fallthru
      _
    // Predicated region
    $region14: #{tpu_custom_call.1} parent=1 // pred_check
      _
    $region15: #{tpu_custom_call.1} parent=1 // pred_check_branch
      %56 = sbr.rel (0) target = $region17
    $region16: #{tpu_custom_call.1} parent=1 // pred_region
      %58 = dma.done [#allocation4], 256
    $region17: #{tpu_custom_call.1} parent=1 // pred_fallthru
      _
    %59 = vsyncpa [#allocation3], 1
    %60 = vsyncpa [#allocation4], 1

</llo_original>
